<compile_context>
chip_gen: v7x
topology: tpu7x:2x2x1
jax: 0.10.0
libtpu: 0.0.40
codegen_flags: <defaults>
</compile_context>

<pallas_src>
import functools

import jax
import jax.numpy as jnp
from jax.experimental import pallas as pl
from jax.experimental.pallas import tpu as pltpu


def _gat_kernel(h_ref, adj_ref, w_ref, b_ref, out_ref,
                wh_ref, ei_ref, ejc_ref, m_ref, l_ref, acc_ref,
                *, alpha, concat, fout, fout_p, sc0, approx_rcp):
    """One (batch-block, key-block) grid step.

    h_ref   : (TB*N, F_in)     flattened input rows (MXU operand dtype)
    adj_ref : (TB, N, TK)      int8 adjacency tile (key-block columns)
    w_ref   : (F_in, cols)     augmented weights [W | W@ai | W@aj]
    b_ref   : (1, cols)        augmented bias
    out_ref : (TB, N, F_out)   unpadded output
    scratch : wh (TB*N, F_out_pad)  Wh slab (bf16 in "fast" mode)
              ei/ejc (TB*N, 1) f32  ai(Wh)/aj(Wh) score columns
              m/l (TB*N, 1) f32     online-softmax running max / denominator
              acc (TB*N, F_out_pad) f32 output accumulator
    """
    TB, N, TK = adj_ref.shape
    kj = pl.program_id(1)
    dot_dtype = wh_ref.dtype

    # Static alignment hints for dynamic (sublane) slice starts.
    row_al = 128 if N % 128 == 0 else (8 if N % 8 == 0 else 1)
    key_al = row_al if (row_al > 1 and TK % row_al == 0) else (
        8 if (N % 8 == 0 and TK % 8 == 0) else 1)

    def _mo(x, a):
        return pl.multiple_of(x, a) if a > 1 else x

    # ---- key block 0: one fused, lane-dense projection for the whole batch block ----
    #   proj[:, :Fout] = Wh     proj[:, sc0] = ai(Wh)     proj[:, sc0+1] = aj(Wh)
    @pl.when(kj == 0)
    def _project():
        proj = jnp.dot(h_ref[...], w_ref[...],
                       preferred_element_type=jnp.float32) + b_ref[...]
        # Wh slab stored once in the MXU operand dtype (bf16 in "fast" mode).
        wh_ref[...] = proj[:, :fout_p].astype(dot_dtype)
        # ai/aj score columns extracted once per batch block, kept in f32.
        ei_ref[...] = proj[:, sc0:sc0 + 1]
        ejc_ref[...] = proj[:, sc0 + 1:sc0 + 2]
        # Online-softmax state init.
        m_ref[...] = jnp.full_like(m_ref, -jnp.inf)
        l_ref[...] = jnp.zeros_like(l_ref)
        acc_ref[...] = jnp.zeros_like(acc_ref)

    # ---- online-softmax update over this key block, one batch element at a time -----
    # lax.fori_loop (not a Python unroll) keeps a single (N, TK) working set live.
    def _attend(b, carry):
        row0 = _mo(b * N, row_al)              # first row of batch element b
        key0 = _mo(b * N + kj * TK, key_al)    # first key row of this key block

        ei = ei_ref[pl.ds(row0, N), :]                        # (N, 1)
        ej = jnp.transpose(ejc_ref[pl.ds(key0, TK), :])       # (1, TK)
        e = ei + ej                                           # e_ij = ai(Wh_i)+aj(Wh_j)
        e = jnp.where(e > 0.0, e, alpha * e)                  # LeakyReLU
        e = jnp.where(adj_ref[b] != 0, e, -1e9)               # native int8 adjacency mask

        m_prev = m_ref[pl.ds(row0, N), :]
        m_new = jnp.maximum(m_prev, jnp.max(e, axis=-1, keepdims=True))
        corr = jnp.exp(m_prev - m_new)
        p = jnp.exp(e - m_new)                                # (N, TK), f32
        l_ref[pl.ds(row0, N), :] = (corr * l_ref[pl.ds(row0, N), :]
                                    + jnp.sum(p, axis=-1, keepdims=True))
        m_ref[pl.ds(row0, N), :] = m_new

        wh_k = wh_ref[pl.ds(key0, TK), :]                     # (TK, F_out_pad)
        pv = jnp.dot(p.astype(dot_dtype), wh_k,
                     preferred_element_type=jnp.float32)
        acc_ref[pl.ds(row0, N), :] = corr * acc_ref[pl.ds(row0, N), :] + pv
        return carry

    jax.lax.fori_loop(0, TB, _attend, 0)

    # TODO(synk): training-mode F.dropout on the attention matrix is not implemented
    # (eval-mode semantics only).

    # ---- last key block: normalize, ELU, unpadded store ------------------------------
    @pl.when(kj == pl.num_programs(1) - 1)
    def _finalize():
        def _write(b, carry):
            row0 = _mo(b * N, row_al)
            inv_l = pl.reciprocal(l_ref[pl.ds(row0, N), :], approx=approx_rcp)
            h_hat = acc_ref[pl.ds(row0, N), :][:, :fout] * inv_l
            if concat:
                # ELU with clamped exp argument (no exp of large positives).
                h_hat = jnp.where(h_hat > 0.0, h_hat,
                                  jnp.exp(jnp.minimum(h_hat, 0.0)) - 1.0)
            out_ref[b] = h_hat.astype(out_ref.dtype)
            return carry

        jax.lax.fori_loop(0, TB, _write, 0)


def _round_up(x, m):
    return (x + m - 1) // m * m


def _mxu_m_target():
    """MXU M-dim fill target: v5e has a 4x128^2 MXU (M=128 fills it); v6e/v7x 256x256."""
    try:
        kind = jax.devices()[0].device_kind.lower()
    except Exception:
        return 256
    if "v5 lite" in kind or "v5lite" in kind or "v5e" in kind:
        return 128
    return 256


def _pick_tb(B, N, m_target):
    """Batch elements per grid step: fill the MXU M-dim, keep >=2 grid steps for
    megacore sharding, and bound the in-kernel working set / VMEM footprint."""
    best = 1
    for tb in range(1, B + 1):
        if B % tb != 0:
            continue
        if tb > 8 or tb * N > 2048:
            break
        if B > 1 and B // tb < 2:
            break
        best = tb
        if tb * N >= m_target:
            break
    # h is passed flattened as (B*N, F_in); its (TB*N, F_in) block needs an 8-aligned
    # sublane extent unless the block covers the whole array.
    if (best * N) % 8 != 0 and best != B:
        best = B
    return best


def _pick_tk(N, key_block):
    """Key-block size for the neighbor axis.  Must be a multiple of 128 that divides N
    (BlockSpec last-dim rule); otherwise the whole key row is a single block."""
    if key_block is not None:
        tk = int(key_block)
        if 0 < tk < N and N % tk == 0 and tk % 128 == 0:
            return tk
        return N
    if N % 128 != 0 or N <= 512:
        return N
    for tk in (512, 256, 128):
        if N % tk == 0:
            return tk
    return N


def _vmem_limit_bytes():
    # ~20% headroom under the generation's physical VMEM (128 MiB v5e/v6e, 64 MiB v7x).
    try:
        return int(pltpu.get_tpu_info().vmem_capacity_bytes * 0.8)
    except Exception:
        return 64 * 1024 * 1024


def graph_attention_layer(h, adj, params, *, alpha=0.2, concat=True,
                          precision="fast", key_block=None):
    """Pallas GAT layer forward.

    h:   (B, N, F_in)  float32
    adj: (B, N, N)     anything where >0 means edge
    params: dict with 'W' (F_out,F_in), 'bW' (F_out,), 'ai' (1,F_out), 'bai' (1,),
            'aj' (1,F_out), 'baj' (1,)
    precision: "highest" (all-f32) or "fast" (bf16 MXU operands, approx softmax rcp).
    key_block: optional neighbor-axis tile (multiple of 128 dividing N); None = auto.
    """
    if precision not in ("highest", "fast"):
        raise ValueError("precision must be 'highest' or 'fast'")

    B, N, Fin = h.shape
    Fout = params["W"].shape[0]
    fout_p = _round_up(Fout, 128)              # lane-dense Wh slab
    # Pack the ai/aj score columns into the existing zero-pad when there is room,
    # otherwise append one extra lane-dense 128 block.
    pack = (fout_p - Fout) >= 2
    cols = fout_p if pack else fout_p + 128
    sc0 = fout_p - 2 if pack else fout_p       # score columns stay outside [0, Fout)

    W = jnp.asarray(params["W"], jnp.float32)        # (F_out, F_in)
    bW = jnp.asarray(params["bW"], jnp.float32)      # (F_out,)
    ai = jnp.asarray(params["ai"], jnp.float32)      # (1, F_out)
    bai = jnp.asarray(params["bai"], jnp.float32)    # (1,)
    aj = jnp.asarray(params["aj"], jnp.float32)      # (1, F_out)
    baj = jnp.asarray(params["baj"], jnp.float32)    # (1,)

    # Augmented weight/bias: a single matmul yields [Wh | ai(Wh) | aj(Wh)] (JAX prep).
    w_aug = jnp.zeros((Fin, cols), jnp.float32)
    w_aug = w_aug.at[:, :Fout].set(W.T)
    w_aug = w_aug.at[:, sc0].set((W.T @ ai.T)[:, 0])
    w_aug = w_aug.at[:, sc0 + 1].set((W.T @ aj.T)[:, 0])
    b_aug = jnp.zeros((1, cols), jnp.float32)
    b_aug = b_aug.at[0, :Fout].set(bW)
    b_aug = b_aug.at[0, sc0].set((bW @ ai.T + bai)[0])
    b_aug = b_aug.at[0, sc0 + 1].set((bW @ aj.T + baj)[0])

    if precision == "fast":
        dot_dtype, approx_rcp = jnp.bfloat16, True
    else:
        dot_dtype, approx_rcp = jnp.float32, False

    # Flatten h so the projection needs no in-kernel reshape (free in XLA).
    h2d = jnp.asarray(h, jnp.float32).astype(dot_dtype).reshape(B * N, Fin)
    w_in = w_aug.astype(dot_dtype)
    adj_i8 = (jnp.asarray(adj) > 0).astype(jnp.int8)   # 4x less HBM than f32
    # TODO(synk): bit-pack adjacency (32 neighbors per uint32 lane) for HBM-bound
    # large-N cases on v5e/v6e.

    TB = _pick_tb(B, N, _mxu_m_target())
    TK = _pick_tk(N, key_block)
    grid = (B // TB, N // TK)
    # TODO(synk): when B // TB == 1, add a parallel query-row grid axis so both v7x
    # TensorCores stay busy on single-graph inputs.

    kernel = functools.partial(
        _gat_kernel, alpha=float(alpha), concat=bool(concat),
        fout=Fout, fout_p=fout_p, sc0=sc0, approx_rcp=approx_rcp)

    flops = int(2 * B * N * Fin * cols + 2 * B * N * N * fout_p + 8 * B * N * N)
    transcendentals = int(B * N * N + 2 * B * N * Fout)
    bytes_accessed = int(h2d.size * h2d.dtype.itemsize + adj_i8.size
                         + w_in.size * w_in.dtype.itemsize + b_aug.size * 4
                         + B * N * Fout * 4)

    out = pl.pallas_call(
        kernel,
        out_shape=jax.ShapeDtypeStruct((B, N, Fout), jnp.float32),
        grid_spec=pltpu.PrefetchScalarGridSpec(
            num_scalar_prefetch=0,
            grid=grid,
            in_specs=[
                pl.BlockSpec((TB * N, Fin), lambda g, kj: (g, 0)),    # h (flattened)
                pl.BlockSpec((TB, N, TK), lambda g, kj: (g, 0, kj)),  # adj int8, key-tiled
                # TODO(synk): single-buffer W_aug/b_aug (pipeline_mode=pl.Buffered(1))
                # once that is plumbed for pallas_call block pipelining.
                pl.BlockSpec((Fin, cols), lambda g, kj: (0, 0)),      # W_aug
                pl.BlockSpec((1, cols), lambda g, kj: (0, 0)),        # b_aug
            ],
            out_specs=pl.BlockSpec((TB, N, Fout), lambda g, kj: (g, 0, 0)),
            scratch_shapes=[
                pltpu.VMEM((TB * N, fout_p), dot_dtype),    # Wh slab
                pltpu.VMEM((TB * N, 1), jnp.float32),       # ai(Wh) score column
                pltpu.VMEM((TB * N, 1), jnp.float32),       # aj(Wh) score column
                pltpu.VMEM((TB * N, 1), jnp.float32),       # online-softmax running max
                pltpu.VMEM((TB * N, 1), jnp.float32),       # online-softmax denominator
                pltpu.VMEM((TB * N, fout_p), jnp.float32),  # output accumulator
            ],
        ),
        compiler_params=pltpu.CompilerParams(
            dimension_semantics=("parallel", "arbitrary"),
            vmem_limit_bytes=_vmem_limit_bytes()),
        cost_estimate=pl.CostEstimate(flops=flops,
                                      transcendentals=transcendentals,
                                      bytes_accessed=bytes_accessed),
    )(h2d, adj_i8, w_in, b_aug)

    return out   # already unpadded (B, N, F_out); no wrapper-side slice copy


def _xavier_uniform(key, shape, gain):
    fan_out, fan_in = shape
    limit = gain * (6.0 / (fan_in + fan_out)) ** 0.5
    return jax.random.uniform(key, shape, jnp.float32, -limit, limit)


def init_params(key, in_feature, out_feature):
    k = jax.random.split(key, 6)
    gain = 1.414
    return {
        "W":   _xavier_uniform(k[0], (out_feature, in_feature), gain),
        "bW":  jax.random.uniform(k[1], (out_feature,), jnp.float32,
                                  -1.0 / in_feature ** 0.5, 1.0 / in_feature ** 0.5),
        "ai":  _xavier_uniform(k[2], (1, out_feature), gain),
        "bai": jax.random.uniform(k[3], (1,), jnp.float32,
                                  -1.0 / out_feature ** 0.5, 1.0 / out_feature ** 0.5),
        "aj":  _xavier_uniform(k[4], (1, out_feature), gain),
        "baj": jax.random.uniform(k[5], (1,), jnp.float32,
                                  -1.0 / out_feature ** 0.5, 1.0 / out_feature ** 0.5),
    }


def _reference(h, adj, params, alpha=0.2, concat=True):
    # Pure-JAX reference mirroring the PyTorch forward (eval-mode dropout).
    Wh = jnp.einsum("bnf,of->bno", h, params["W"]) + params["bW"]
    Wh1 = jnp.einsum("bno,po->bnp", Wh, params["ai"]) + params["bai"]   # (B,N,1)
    Wh2 = jnp.einsum("bno,po->bnp", Wh, params["aj"]) + params["baj"]   # (B,N,1)
    e = Wh1 + jnp.swapaxes(Wh2, 1, 2)
    e = jnp.where(e > 0, e, alpha * e)
    att = jnp.where(adj > 0, e, -1e9)
    att = jax.nn.softmax(att, axis=2)
    h_hat = jnp.einsum("bnm,bmo->bno", att, Wh)
    return jax.nn.elu(h_hat) if concat else h_hat


if __name__ == "__main__":
    key = jax.random.PRNGKey(0)
    alpha, concat = 0.2, True          # dropout=0.1 is inactive (eval-mode semantics)

    # --- case 1: small shapes, single key block --------------------------------------
    B, N, Fin, Fout = 2, 16, 32, 32
    kh, kadj, kp = jax.random.split(key, 3)
    h = jax.random.normal(kh, (B, N, Fin), jnp.float32)
    adj = (jax.random.uniform(kadj, (B, N, N)) > 0.5).astype(jnp.float32)
    adj = jnp.maximum(adj, jnp.eye(N, dtype=jnp.float32)[None])   # self-loops
    params = init_params(kp, Fin, Fout)
    ref = _reference(h, adj, params, alpha=alpha, concat=concat)

    out_hi = jax.block_until_ready(
        graph_attention_layer(h, adj, params, alpha=alpha, concat=concat,
                              precision="highest"))
    assert out_hi.shape == (B, N, Fout)
    assert jnp.allclose(out_hi, ref, atol=3e-4, rtol=3e-4), "highest-precision mismatch"

    out_fast = jax.block_until_ready(
        graph_attention_layer(h, adj, params, alpha=alpha, concat=concat,
                              precision="fast"))
    assert out_fast.shape == (B, N, Fout)
    assert jnp.allclose(out_fast, ref, atol=1e-1, rtol=1e-1), "fast-precision mismatch"

    # --- case 2: key-tiled online-softmax path (2 key blocks of 128) -----------------
    key2 = jax.random.PRNGKey(1)
    B2, N2, Fin2, Fout2 = 2, 256, 32, 64
    kh2, kadj2, kp2 = jax.random.split(key2, 3)
    h2 = jax.random.normal(kh2, (B2, N2, Fin2), jnp.float32)
    adj2 = (jax.random.uniform(kadj2, (B2, N2, N2)) > 0.7).astype(jnp.float32)
    adj2 = jnp.maximum(adj2, jnp.eye(N2, dtype=jnp.float32)[None])
    params2 = init_params(kp2, Fin2, Fout2)
    ref2 = _reference(h2, adj2, params2, alpha=alpha, concat=concat)

    out2 = jax.block_until_ready(
        graph_attention_layer(h2, adj2, params2, alpha=alpha, concat=concat,
                              precision="highest", key_block=128))
    assert out2.shape == (B2, N2, Fout2)
    assert jnp.allclose(out2, ref2, atol=1e-2, rtol=1e-2), "key-tiled mismatch"

    print("KERNEL_OK")
</pallas_src>

<mosaic_0001>
module attributes {stable_mosaic.version = 11 : i64} {
  func.func @_gat_kernel(%arg0: i32, %arg1: i32, %arg2: memref<16x32xf32, #tpu.memory_space<vmem>>, %arg3: memref<1x16x16xi8, #tpu.memory_space<vmem>>, %arg4: memref<32x128xf32, #tpu.memory_space<vmem>>, %arg5: memref<1x128xf32, #tpu.memory_space<vmem>>, %arg6: memref<1x16x32xf32, #tpu.memory_space<vmem>>, %arg7: memref<16x128xf32, #tpu.memory_space<vmem>>, %arg8: memref<16x1xf32, #tpu.memory_space<vmem>>, %arg9: memref<16x1xf32, #tpu.memory_space<vmem>>, %arg10: memref<16x1xf32, #tpu.memory_space<vmem>>, %arg11: memref<16x1xf32, #tpu.memory_space<vmem>>, %arg12: memref<16x128xf32, #tpu.memory_space<vmem>>) attributes {dimension_semantics = [#tpu.dimension_semantics<parallel>, #tpu.dimension_semantics<arbitrary>], iteration_bounds = array<i64: 2, 1>, scalar_prefetch = 0 : i64, scratch_operands = 6 : i64, tpu.core_type = #tpu.core_type<tc>, window_params = [{transform_indices = @transform_0, window_bounds = array<i64: 16, 32>}, {transform_indices = @transform_1, window_bounds = array<i64: 1, 16, 16>}, {pipeline_mode = #tpu.pipeline_mode<synchronous>, transform_indices = @transform_2, window_bounds = array<i64: 32, 128>}, {pipeline_mode = #tpu.pipeline_mode<synchronous>, transform_indices = @transform_3, window_bounds = array<i64: 1, 128>}, {transform_indices = @transform_4, window_bounds = array<i64: 1, 16, 32>}]} {
    %c0_i32 = arith.constant 0 : i32
    %0 = arith.cmpi eq, %arg1, %c0_i32 : i32
    %1 = arith.extui %0 : i1 to i32
    %c0_i32_0 = arith.constant 0 : i32
    %2 = arith.cmpi ne, %1, %c0_i32_0 : i32
    scf.if %2 {
      %c0_21 = arith.constant 0 : index
      %c0_22 = arith.constant 0 : index
      %62 = vector.load %arg2[%c0_21, %c0_22] : memref<16x32xf32, #tpu.memory_space<vmem>>, vector<16x32xf32>
      %c0_23 = arith.constant 0 : index
      %c0_24 = arith.constant 0 : index
      %63 = vector.load %arg4[%c0_23, %c0_24] : memref<32x128xf32, #tpu.memory_space<vmem>>, vector<32x128xf32>
      %cst_25 = arith.constant dense<0.000000e+00> : vector<16x128xf32>
      %64 = tpu.matmul %62, %63, %cst_25 {dimension_numbers = #tpu.dot_dimension_numbers<[1], [0], [0], [1], [0, 0, 1, 1], [], []>} : vector<16x32xf32>, vector<32x128xf32>, vector<16x128xf32> -> vector<16x128xf32>
      %c0_26 = arith.constant 0 : index
      %c0_27 = arith.constant 0 : index
      %65 = vector.load %arg5[%c0_26, %c0_27] : memref<1x128xf32, #tpu.memory_space<vmem>>, vector<1x128xf32>
      %66 = vector.broadcast %65 : vector<1x128xf32> to vector<16x128xf32>
      %67 = arith.addf %64, %66 : vector<16x128xf32>
      %c0_28 = arith.constant 0 : index
      %c0_29 = arith.constant 0 : index
      %68 = vector.load %arg7[%c0_28, %c0_29] : memref<16x128xf32, #tpu.memory_space<vmem>>, vector<16x128xf32>
      tpu.vector_store %arg7[%c0_28, %c0_29], %67 {strides = array<i32>} : memref<16x128xf32, #tpu.memory_space<vmem>>, vector<16x128xf32>,
      %69 = vector.extract_strided_slice %67 {offsets = [0, 126], sizes = [16, 1], strides = [1, 1]} : vector<16x128xf32> to vector<16x1xf32>
      %c0_30 = arith.constant 0 : index
      %c0_31 = arith.constant 0 : index
      %70 = vector.load %arg8[%c0_30, %c0_31] : memref<16x1xf32, #tpu.memory_space<vmem>>, vector<16x1xf32>
      tpu.vector_store %arg8[%c0_30, %c0_31], %69 {strides = array<i32>} : memref<16x1xf32, #tpu.memory_space<vmem>>, vector<16x1xf32>,
      %71 = vector.extract_strided_slice %67 {offsets = [0, 127], sizes = [16, 1], strides = [1, 1]} : vector<16x128xf32> to vector<16x1xf32>
      %c0_32 = arith.constant 0 : index
      %c0_33 = arith.constant 0 : index
      %72 = vector.load %arg9[%c0_32, %c0_33] : memref<16x1xf32, #tpu.memory_space<vmem>>, vector<16x1xf32>
      tpu.vector_store %arg9[%c0_32, %c0_33], %71 {strides = array<i32>} : memref<16x1xf32, #tpu.memory_space<vmem>>, vector<16x1xf32>,
      %cst_34 = arith.constant 0xFF800000 : f32
      %73 = vector.broadcast %cst_34 : f32 to vector<16x1xf32>
      %c0_35 = arith.constant 0 : index
      %c0_36 = arith.constant 0 : index
      %74 = vector.load %arg10[%c0_35, %c0_36] : memref<16x1xf32, #tpu.memory_space<vmem>>, vector<16x1xf32>
      tpu.vector_store %arg10[%c0_35, %c0_36], %73 {strides = array<i32>} : memref<16x1xf32, #tpu.memory_space<vmem>>, vector<16x1xf32>,
      %cst_37 = arith.constant 0.000000e+00 : f32
      %75 = vector.broadcast %cst_37 : f32 to vector<16x1xf32>
      %c0_38 = arith.constant 0 : index
      %c0_39 = arith.constant 0 : index
      %76 = vector.load %arg11[%c0_38, %c0_39] : memref<16x1xf32, #tpu.memory_space<vmem>>, vector<16x1xf32>
      tpu.vector_store %arg11[%c0_38, %c0_39], %75 {strides = array<i32>} : memref<16x1xf32, #tpu.memory_space<vmem>>, vector<16x1xf32>,
      %cst_40 = arith.constant 0.000000e+00 : f32
      %77 = vector.broadcast %cst_40 : f32 to vector<16x128xf32>
      %c0_41 = arith.constant 0 : index
      %c0_42 = arith.constant 0 : index
      %78 = vector.load %arg12[%c0_41, %c0_42] : memref<16x128xf32, #tpu.memory_space<vmem>>, vector<16x128xf32>
      tpu.vector_store %arg12[%c0_41, %c0_42], %77 {strides = array<i32>} : memref<16x128xf32, #tpu.memory_space<vmem>>, vector<16x128xf32>,
    } else {
    }
    %c0_i32_1 = arith.constant 0 : i32
    %c16_i32 = arith.constant 16 : i32
    %3 = arith.muli %c0_i32_1, %c16_i32 : i32
    %4 = tpu.assume_multiple %3, 8 : i32
    %c16_i32_2 = arith.constant 16 : i32
    %5 = arith.muli %c0_i32_1, %c16_i32_2 : i32
    %c16_i32_3 = arith.constant 16 : i32
    %6 = arith.muli %arg1, %c16_i32_3 : i32
    %7 = arith.addi %5, %6 : i32
    %8 = tpu.assume_multiple %7, 8 : i32
    %9 = arith.index_cast %4 : i32 to index
    %c0 = arith.constant 0 : index
    %10 = vector.load %arg8[%9, %c0] : memref<16x1xf32, #tpu.memory_space<vmem>>, vector<16x1xf32>
    %11 = arith.index_cast %8 : i32 to index
    %c0_4 = arith.constant 0 : index
    %12 = vector.load %arg9[%11, %c0_4] : memref<16x1xf32, #tpu.memory_space<vmem>>, vector<16x1xf32>
    %13 = tpu.transpose %12, [1, 0] : vector<16x1xf32> -> vector<1x16xf32>
    %14 = vector.broadcast %10 : vector<16x1xf32> to vector<16x16xf32>
    %15 = vector.broadcast %13 : vector<1x16xf32> to vector<16x16xf32>
    %16 = arith.addf %14, %15 : vector<16x16xf32>
    %cst = arith.constant 0.000000e+00 : f32
    %17 = vector.broadcast %cst : f32 to vector<16x16xf32>
    %18 = arith.cmpf ogt, %16, %17 : vector<16x16xf32>
    %cst_5 = arith.constant 2.000000e-01 : f32
    %19 = vector.broadcast %cst_5 : f32 to vector<16x16xf32>
    %20 = arith.mulf %19, %16 : vector<16x16xf32>
    %21 = arith.select %18, %16, %20 : vector<16x16xi1>, vector<16x16xf32>
    %22 = arith.index_cast %c0_i32_1 : i32 to index
    %c0_6 = arith.constant 0 : index
    %c0_7 = arith.constant 0 : index
    %23 = vector.load %arg3[%22, %c0_6, %c0_7] : memref<1x16x16xi8, #tpu.memory_space<vmem>>, vector<1x16x16xi8>
    %24 = vector.shape_cast %23 : vector<1x16x16xi8> to vector<16x16xi8>
    %c0_i8 = arith.constant 0 : i8
    %25 = vector.broadcast %c0_i8 : i8 to vector<16x16xi8>
    %26 = arith.cmpi ne, %24, %25 : vector<16x16xi8>
    %cst_8 = arith.constant -1.000000e+09 : f32
    %27 = vector.broadcast %cst_8 : f32 to vector<16x16xf32>
    %28 = arith.select %26, %21, %27 : vector<16x16xi1>, vector<16x16xf32>
    %29 = arith.index_cast %4 : i32 to index
    %c0_9 = arith.constant 0 : index
    %30 = vector.load %arg10[%29, %c0_9] : memref<16x1xf32, #tpu.memory_space<vmem>>, vector<16x1xf32>
    %cst_10 = arith.constant dense<0xFF800000> : vector<16xf32>
    %31 = vector.multi_reduction <maximumf>, %28, %cst_10 [1] : vector<16x16xf32> to vector<16xf32>
    %32 = vector.shape_cast %31 : vector<16xf32> to vector<16x1xf32>
    %33 = arith.maximumf %30, %32 : vector<16x1xf32>
    %34 = arith.subf %30, %33 : vector<16x1xf32>
    %35 = math.exp %34 : vector<16x1xf32>
    %36 = vector.broadcast %33 : vector<16x1xf32> to vector<16x16xf32>
    %37 = arith.subf %28, %36 : vector<16x16xf32>
    %38 = math.exp %37 : vector<16x16xf32>
    %39 = arith.index_cast %4 : i32 to index
    %c0_11 = arith.constant 0 : index
    %40 = vector.load %arg11[%39, %c0_11] : memref<16x1xf32, #tpu.memory_space<vmem>>, vector<16x1xf32>
    %41 = arith.mulf %35, %40 : vector<16x1xf32>
    %cst_12 = arith.constant dense<0.000000e+00> : vector<16xf32>
    %42 = vector.multi_reduction <add>, %38, %cst_12 [1] : vector<16x16xf32> to vector<16xf32>
    %43 = vector.shape_cast %42 : vector<16xf32> to vector<16x1xf32>
    %44 = arith.addf %41, %43 : vector<16x1xf32>
    %45 = arith.index_cast %4 : i32 to index
    %c0_13 = arith.constant 0 : index
    %46 = vector.load %arg11[%45, %c0_13] : memref<16x1xf32, #tpu.memory_space<vmem>>, vector<16x1xf32>
    tpu.vector_store %arg11[%45, %c0_13], %44 {strides = array<i32>} : memref<16x1xf32, #tpu.memory_space<vmem>>, vector<16x1xf32>,
    %47 = arith.index_cast %4 : i32 to index
    %c0_14 = arith.constant 0 : index
    %48 = vector.load %arg10[%47, %c0_14] : memref<16x1xf32, #tpu.memory_space<vmem>>, vector<16x1xf32>
    tpu.vector_store %arg10[%47, %c0_14], %33 {strides = array<i32>} : memref<16x1xf32, #tpu.memory_space<vmem>>, vector<16x1xf32>,
    %49 = arith.index_cast %8 : i32 to index
    %c0_15 = arith.constant 0 : index
    %50 = vector.load %arg7[%49, %c0_15] : memref<16x128xf32, #tpu.memory_space<vmem>>, vector<16x128xf32>
    %cst_16 = arith.constant dense<0.000000e+00> : vector<16x128xf32>
    %51 = tpu.matmul %38, %50, %cst_16 {dimension_numbers = #tpu.dot_dimension_numbers<[1], [0], [0], [1], [0, 0, 1, 1], [], []>} : vector<16x16xf32>, vector<16x128xf32>, vector<16x128xf32> -> vector<16x128xf32>
    %52 = arith.index_cast %4 : i32 to index
    %c0_17 = arith.constant 0 : index
    %53 = vector.load %arg12[%52, %c0_17] : memref<16x128xf32, #tpu.memory_space<vmem>>, vector<16x128xf32>
    %54 = vector.broadcast %35 : vector<16x1xf32> to vector<16x128xf32>
    %55 = arith.mulf %54, %53 : vector<16x128xf32>
    %56 = arith.addf %55, %51 : vector<16x128xf32>
    %57 = arith.index_cast %4 : i32 to index
    %c0_18 = arith.constant 0 : index
    %58 = vector.load %arg12[%57, %c0_18] : memref<16x128xf32, #tpu.memory_space<vmem>>, vector<16x128xf32>
    tpu.vector_store %arg12[%57, %c0_18], %56 {strides = array<i32>} : memref<16x128xf32, #tpu.memory_space<vmem>>, vector<16x128xf32>,
    %c1_i32 = arith.constant 1 : i32
    %c0_i32_19 = arith.constant 0 : i32
    %59 = arith.cmpi eq, %arg1, %c0_i32_19 : i32
    %60 = arith.extui %59 : i1 to i32
    %c0_i32_20 = arith.constant 0 : i32
    %61 = arith.cmpi ne, %60, %c0_i32_20 : i32
    scf.if %61 {
      %c0_i32_21 = arith.constant 0 : i32
      %c16_i32_22 = arith.constant 16 : i32
      %62 = arith.muli %c0_i32_21, %c16_i32_22 : i32
      %63 = tpu.assume_multiple %62, 8 : i32
      %64 = arith.index_cast %63 : i32 to index
      %c0_23 = arith.constant 0 : index
      %65 = vector.load %arg11[%64, %c0_23] : memref<16x1xf32, #tpu.memory_space<vmem>>, vector<16x1xf32>
      %66 = tpu.reciprocal %65 : vector<16x1xf32> -> vector<16x1xf32>
      %67 = arith.index_cast %63 : i32 to index
      %c0_24 = arith.constant 0 : index
      %68 = vector.load %arg12[%67, %c0_24] : memref<16x128xf32, #tpu.memory_space<vmem>>, vector<16x128xf32>
      %69 = vector.extract_strided_slice %68 {offsets = [0, 0], sizes = [16, 32], strides = [1, 1]} : vector<16x128xf32> to vector<16x32xf32>
      %70 = vector.broadcast %66 : vector<16x1xf32> to vector<16x32xf32>
      %71 = arith.mulf %69, %70 : vector<16x32xf32>
      %cst_25 = arith.constant 0.000000e+00 : f32
      %72 = vector.broadcast %cst_25 : f32 to vector<16x32xf32>
      %73 = arith.cmpf ogt, %71, %72 : vector<16x32xf32>
      %cst_26 = arith.constant 0.000000e+00 : f32
      %74 = vector.broadcast %cst_26 : f32 to vector<16x32xf32>
      %75 = arith.minimumf %71, %74 : vector<16x32xf32>
      %76 = math.exp %75 : vector<16x32xf32>
      %cst_27 = arith.constant 1.000000e+00 : f32
      %77 = vector.broadcast %cst_27 : f32 to vector<16x32xf32>
      %78 = arith.subf %76, %77 : vector<16x32xf32>
      %79 = arith.select %73, %71, %78 : vector<16x32xi1>, vector<16x32xf32>
      %80 = arith.index_cast %c0_i32_21 : i32 to index
      %c0_28 = arith.constant 0 : index
      %c0_29 = arith.constant 0 : index
      %81 = vector.load %arg6[%80, %c0_28, %c0_29] : memref<1x16x32xf32, #tpu.memory_space<vmem>>, vector<1x16x32xf32>
      %82 = vector.shape_cast %81 : vector<1x16x32xf32> to vector<16x32xf32>
      %83 = vector.shape_cast %79 : vector<16x32xf32> to vector<1x16x32xf32>
      tpu.vector_store %arg6[%80, %c0_28, %c0_29], %83 {strides = array<i32>} : memref<1x16x32xf32, #tpu.memory_space<vmem>>, vector<1x16x32xf32>,
      %c1_i32_30 = arith.constant 1 : i32
    } else {
    }
    return
  }
  func.func @transform_0(%arg0: i32, %arg1: i32) -> (i32, i32) {
    %c0_i32 = arith.constant 0 : i32
    %c0_i32_0 = arith.constant 0 : i32
    return %arg0, %c0_i32 : i32, i32
  }
  func.func @transform_1(%arg0: i32, %arg1: i32) -> (i32, i32, i32) {
    %c0_i32 = arith.constant 0 : i32
    %c0_i32_0 = arith.constant 0 : i32
    return %arg0, %c0_i32, %arg1 : i32, i32, i32
  }
  func.func @transform_2(%arg0: i32, %arg1: i32) -> (i32, i32) {
    %c0_i32 = arith.constant 0 : i32
    %c0_i32_0 = arith.constant 0 : i32
    %c0_i32_1 = arith.constant 0 : i32
    return %c0_i32, %c0_i32_0 : i32, i32
  }
  func.func @transform_3(%arg0: i32, %arg1: i32) -> (i32, i32) {
    %c0_i32 = arith.constant 0 : i32
    %c0_i32_0 = arith.constant 0 : i32
    %c0_i32_1 = arith.constant 0 : i32
    return %c0_i32, %c0_i32_0 : i32, i32
  }
  func.func @transform_4(%arg0: i32, %arg1: i32) -> (i32, i32, i32) {
    %c0_i32 = arith.constant 0 : i32
    %c0_i32_0 = arith.constant 0 : i32
    %c0_i32_1 = arith.constant 0 : i32
    return %arg0, %c0_i32, %c0_i32_0 : i32, i32, i32
  }
}

</mosaic_0001>

<llo_original>
// kernel: tpu_custom_call.1
$region0: #{tpu_custom_call.1}
  #allocation0 [shape = 'u32[]', space=smem, size = 0x4, offset = 0x4, fixed_abs, tag = 'smem constant byte address 0x4 - core index']
  #allocation1 [shape = 'u32[144,128]{1,0:T(1,128)}', space=vmem, size = 0x12000, scoped, tag = 'internal scratch']
  #allocation2 [shape = 'f32[16,128]{1,0:T(8,128)}', space=vmem, size = 0x2000, scoped, tag = 'scratch operand']
  #allocation3 [shape = 'f32[16,1]{1,0:T(8,128)}', space=vmem, size = 0x2000, scoped, tag = 'scratch operand']
  #allocation4 [shape = 'f32[16,1]{1,0:T(8,128)}', space=vmem, size = 0x2000, scoped, tag = 'scratch operand']
  #allocation5 [shape = 'f32[16,1]{1,0:T(8,128)}', space=vmem, size = 0x2000, scoped, tag = 'scratch operand']
  #allocation6 [shape = 'f32[16,1]{1,0:T(8,128)}', space=vmem, size = 0x2000, scoped, tag = 'scratch operand']
  #allocation7 [shape = 'f32[16,128]{1,0:T(8,128)}', space=vmem, size = 0x2000, scoped, tag = 'scratch operand']
  %s0 = inlined_call_operand.hbm [shape: f32[32,32], index: 0, kind: input, shape index: {}]
  %s1 = inlined_call_operand.hbm [shape: s8[2,16,16], index: 1, kind: input, shape index: {}]
  %s2 = inlined_call_operand.hbm [shape: f32[32,128], index: 2, kind: input, shape index: {}]
  %s3 = inlined_call_operand.hbm [shape: f32[1,128], index: 3, kind: input, shape index: {}]
  %s4 = inlined_call_operand.hbm [shape: f32[2,16,32], index: 4, kind: output, shape index: {}]
  %s5 = sld [smem:[#allocation0]]
  $region73: #{tpu_custom_call.1} parent=0
    _
  %s7 = ssub.s32 1, %s5
  %s8 = scalar_select 0, %s7, %s5
  $region1: #{tpu_custom_call.1} parent=0
    #allocation8 [shape = 'u8[16384]{0}', space=vmem, size = 0x4000, scoped, tag = 'input window, operand 0']
    #allocation9 [shape = 's32[2]{0}', space=sflag, size = 0x8, scoped, tag = 'scoped memory for tpu_custom_call.1']
    #allocation10 [shape = 's32[2]{0}', space=sflag, size = 0x8, scoped, tag = 'scoped memory for tpu_custom_call.1']
    #allocation11 [shape = 'u8[4096]{0}', space=vmem, size = 0x1000, scoped, tag = 'input window, operand 1']
    #allocation12 [shape = 's32[2]{0}', space=sflag, size = 0x8, scoped, tag = 'scoped memory for tpu_custom_call.1']
    #allocation13 [shape = 'u8[16384]{0}', space=vmem, size = 0x4000, scoped, tag = 'input window, operand 2, single buffered']
    #allocation14 [shape = 'u8[512]{0}', space=vmem, size = 0x400, scoped, tag = 'input window, operand 3, single buffered']
    #allocation15 [shape = 's32[1]{0}', space=sflag, size = 0x4, scoped, tag = 'scoped memory for tpu_custom_call.1']
    #allocation16 [shape = 'u8[16384]{0}', space=vmem, size = 0x4000, scoped, tag = 'output window, operand 0']
    %9 = vsyncpa [#allocation9], 0
    %s10 = scalar_lea.sflag [#allocation9], 1
    %11 = vsyncpa %s10, 0
    %12 = vsyncpa [#allocation12], 0
    %s13 = scalar_lea.sflag [#allocation12], 1
    %14 = vsyncpa %s13, 0
    %15 = vsyncpa [#allocation15], 0
    %16 = vsyncpa [#allocation10], 0
    %s17 = scalar_lea.sflag [#allocation10], 1
    %18 = vsyncpa %s17, 0
    loop: start=0, step=1, limit=4
    $region2: #{tpu_custom_call.1} parent=1 // loop_pre_header
      _
    $region3: #{tpu_custom_call.1} parent=1 // loop_header
      %s20 = sphi 0, %s24
      %p21 = scmp.ge.s32.totalorder %s20, 4
      %s27 = sphi 0, %s39
      %s28 = sphi 0, %s35
      %s29 = sphi 0, %s27
      %s30 = sphi 0, %s28
      %s31 = sphi 0, %s29
      %s32 = sphi 0, %s30
      %s42 = sphi 0, %s44
      %s45 = sphi 0, %s42
      %s46 = sphi 0, %s45
      %s62 = sphi 0, %s46
      %s70 = sphi 0, %s72
      %s73 = sphi 0, %s70
      %s74 = sphi 0, %s73
      %s90 = sphi 0, %s74
      %s94 = sphi 0, %s94
      %s96 = sphi 0, %s94
      %s97 = sphi 0, %s96
      %s111 = sphi 0, %s97
      %s115 = sphi 0, %s115
      %s117 = sphi 0, %s115
      %s118 = sphi 0, %s117
      %s132 = sphi 0, %s118
      %s138 = sphi 0, %s140
      %s141 = sphi 0, %s138
      %s142 = sphi 0, %s141
      %s158 = sphi 0, %s142
    $region4: #{tpu_custom_call.1} parent=1 // loop_header_branch
      %23 = sbr.rel (%p21) target = $region8
    $region5: #{tpu_custom_call.1} parent=1 // loop_body
      %s25 = ssub.s32 %s20, 1
      %s26 = ssub.s32 %s20, 2
      %s33 = sadd.s32 1, %s28
      %p34 = scmp.ge.s32.totalorder %s33, 1
      %s35 = scalar_select %p34, 0, %s33
      %s36 = sadd.s32 1, %s27
      %s37 = scalar_select %p34, %s36, %s27
      %p38 = scmp.ge.s32.totalorder %s37, 2
      %s39 = scalar_select %p38, 0, %s37
      %s40 = ssub.s32 %s27, %s39
      %p41 = scmp.eq.s32.totalorder %s40, 0
      %s43 = sadd.s32 %s42, 1
      %s44 = scalar_select %p41, %s42, %s43
      %p47 = pneg %p41
      %p48 = scmp.eq.s32.totalorder %s20, 1
      %p49 = por %p47, %p48
      %p50 = scmp.ne.s32.totalorder %s42, %s45
      %p51 = scmp.eq.s32.totalorder %s20, 0
      %p52 = por %p50, %p51
      %p53 = scmp.ne.s32.totalorder %s42, %s45
      %p54 = scmp.eq.s32.totalorder %s25, 1
      %p55 = por %p53, %p54
      %p56 = scmp.ne.s32.totalorder %s45, %s46
      %p57 = scmp.eq.s32.totalorder %s25, 0
      %p58 = por %p56, %p57
      %p59 = scmp.ne.s32.totalorder %s45, %s46
      %p60 = scmp.eq.s32.totalorder %s26, 1
      %p61 = por %p59, %p60
      %p63 = scmp.ne.s32.totalorder %s46, %s62
      %p64 = scmp.eq.s32.totalorder %s26, 0
      %p65 = por %p63, %p64
      %s66 = ssub.s32 %s27, %s39
      %s67 = ssub.s32 %s28, %s35
      %s68 = sor.u32 %s66, %s67
      %p69 = scmp.eq.s32.totalorder %s68, 0
      %s71 = sadd.s32 %s70, 1
      %s72 = scalar_select %p69, %s70, %s71
      %p75 = pneg %p69
      %p76 = scmp.eq.s32.totalorder %s20, 1
      %p77 = por %p75, %p76
      %p78 = scmp.ne.s32.totalorder %s70, %s73
      %p79 = scmp.eq.s32.totalorder %s20, 0
      %p80 = por %p78, %p79
      %p81 = scmp.ne.s32.totalorder %s70, %s73
      %p82 = scmp.eq.s32.totalorder %s25, 1
      %p83 = por %p81, %p82
      %p84 = scmp.ne.s32.totalorder %s73, %s74
      %p85 = scmp.eq.s32.totalorder %s25, 0
      %p86 = por %p84, %p85
      %p87 = scmp.ne.s32.totalorder %s73, %s74
      %p88 = scmp.eq.s32.totalorder %s26, 1
      %p89 = por %p87, %p88
      %p91 = scmp.ne.s32.totalorder %s74, %s90
      %p92 = scmp.eq.s32.totalorder %s26, 0
      %p93 = por %p91, %p92
      %s95 = sadd.s32 %s94, 1
      %p98 = scmp.eq.s32.totalorder %s20, 1
      %p99 = scmp.ne.s32.totalorder %s94, %s96
      %p100 = scmp.eq.s32.totalorder %s20, 0
      %p101 = por %p99, %p100
      %p102 = scmp.ne.s32.totalorder %s94, %s96
      %p103 = scmp.eq.s32.totalorder %s25, 1
      %p104 = por %p102, %p103
      %p105 = scmp.ne.s32.totalorder %s96, %s97
      %p106 = scmp.eq.s32.totalorder %s25, 0
      %p107 = por %p105, %p106
      %p108 = scmp.ne.s32.totalorder %s96, %s97
      %p109 = scmp.eq.s32.totalorder %s26, 1
      %p110 = por %p108, %p109
      %p112 = scmp.ne.s32.totalorder %s97, %s111
      %p113 = scmp.eq.s32.totalorder %s26, 0
      %p114 = por %p112, %p113
      %s116 = sadd.s32 %s115, 1
      %p119 = scmp.eq.s32.totalorder %s20, 1
      %p120 = scmp.ne.s32.totalorder %s115, %s117
      %p121 = scmp.eq.s32.totalorder %s20, 0
      %p122 = por %p120, %p121
      %p123 = scmp.ne.s32.totalorder %s115, %s117
      %p124 = scmp.eq.s32.totalorder %s25, 1
      %p125 = por %p123, %p124
      %p126 = scmp.ne.s32.totalorder %s117, %s118
      %p127 = scmp.eq.s32.totalorder %s25, 0
      %p128 = por %p126, %p127
      %p129 = scmp.ne.s32.totalorder %s117, %s118
      %p130 = scmp.eq.s32.totalorder %s26, 1
      %p131 = por %p129, %p130
      %p133 = scmp.ne.s32.totalorder %s118, %s132
      %p134 = scmp.eq.s32.totalorder %s26, 0
      %p135 = por %p133, %p134
      %s136 = ssub.s32 %s27, %s39
      %p137 = scmp.eq.s32.totalorder %s136, 0
      %s139 = sadd.s32 %s138, 1
      %s140 = scalar_select %p137, %s138, %s139
      %p143 = pneg %p137
      %p144 = scmp.eq.s32.totalorder %s20, 1
      %p145 = por %p143, %p144
      %p146 = scmp.ne.s32.totalorder %s138, %s141
      %p147 = scmp.eq.s32.totalorder %s20, 0
      %p148 = por %p146, %p147
      %p149 = scmp.ne.s32.totalorder %s138, %s141
      %p150 = scmp.eq.s32.totalorder %s25, 1
      %p151 = por %p149, %p150
      %p152 = scmp.ne.s32.totalorder %s141, %s142
      %p153 = scmp.eq.s32.totalorder %s25, 0
      %p154 = por %p152, %p153
      %p155 = scmp.ne.s32.totalorder %s141, %s142
      %p156 = scmp.eq.s32.totalorder %s26, 1
      %p157 = por %p155, %p156
      %p159 = scmp.ne.s32.totalorder %s142, %s158
      %p160 = scmp.eq.s32.totalorder %s26, 0
      %p161 = por %p159, %p160
      %p162 = scmp.le.s32.totalorder 1, %s20
      %p163 = scmp.lt.s32.totalorder %s20, 3
      %p164 = pnand %p162, %p163
      %p165 = pneg %p164
      // Predicated region
      $region9: #{tpu_custom_call.1} parent=5 // pred_check
        _
      $region10: #{tpu_custom_call.1} parent=5 // pred_check_branch
        %167 = sbr.rel (%p164) target = $region12
      $region11: #{tpu_custom_call.1} parent=5 // pred_region
        %s168 = ssub.s32 %s20, 1
        // Predicated region
        $region13: #{tpu_custom_call.1} parent=11 // pred_check
          %p169 = pneg %p107
        $region14: #{tpu_custom_call.1} parent=11 // pred_check_branch
          %171 = sbr.rel (%p169) target = $region16
        $region15: #{tpu_custom_call.1} parent=11 // pred_region
          %s173 = ssub.s32 512, 512
          %174 = vsyncadd [#allocation12], %s173
          %s175 = sshll.u32 [#allocation13], 4
          %s176 = int_to_ptr.vmem [resolvable:$true] %s175
          %181 = dma.hbm_to_vmem [thread:$0]  %s2, 512, %s176, [#allocation12], 128, 128, 8
        $region16: #{tpu_custom_call.1} parent=11 // pred_fallthru
          _
        // Predicated region
        $region17: #{tpu_custom_call.1} parent=11 // pred_check
          %p182 = pneg %p128
        $region18: #{tpu_custom_call.1} parent=11 // pred_check_branch
          %184 = sbr.rel (%p182) target = $region20
        $region19: #{tpu_custom_call.1} parent=11 // pred_region
          %s186 = ssub.s32 16, 16
          %187 = vsyncadd [#allocation15], %s186
          %s189 = sshll.u32 [#allocation14], 4
          %s190 = int_to_ptr.vmem [resolvable:$true] %s189
          %192 = dma.hbm_to_vmem [thread:$0]  %s3, 16, %s190, [#allocation15]
        $region20: #{tpu_custom_call.1} parent=11 // pred_fallthru
          _
      $region12: #{tpu_custom_call.1} parent=5 // pred_fallthru
        _
      %p193 = scmp.lt.s32.totalorder %s20, 2
      // Predicated region
      $region21: #{tpu_custom_call.1} parent=5 // pred_check
        %p194 = pneg %p193
      $region22: #{tpu_custom_call.1} parent=5 // pred_check_branch
        %196 = sbr.rel (%p194) target = $region24
      $region23: #{tpu_custom_call.1} parent=5 // pred_region
        // Predicated region
        $region25: #{tpu_custom_call.1} parent=23 // pred_check
          %p197 = pneg %p52
        $region26: #{tpu_custom_call.1} parent=23 // pred_check_branch
          %199 = sbr.rel (%p197) target = $region28
        $region27: #{tpu_custom_call.1} parent=23 // pred_region
          %s200 = sand.u32 %s42, 1
          %s201 = scalar_lea.sflag [#allocation9], %s200
          %s202 = sand.u32 %s42, 1
          %s203 = smul.addr %s202, 16
          %s204 = scalar_lea.vmem [#allocation8], %s203
          %s205 = smul.u32 2, %s27
          %s207 = ssub.s32 256, 256
          %208 = vsyncadd %s201, %s207
          %s209 = smul.addr %s205, 128
          %s210 = scalar_lea.hbm %s0, %s209
          %s211 = sshll.u32 %s204, 4
          %s212 = int_to_ptr.vmem [resolvable:$true] %s211
          %217 = dma.hbm_to_vmem [thread:$0]  %s210, 256, %s212, %s201, 128, 128, 8
        $region28: #{tpu_custom_call.1} parent=23 // pred_fallthru
          _
        // Predicated region
        $region29: #{tpu_custom_call.1} parent=23 // pred_check
          %p218 = pneg %p80
        $region30: #{tpu_custom_call.1} parent=23 // pred_check_branch
          %220 = sbr.rel (%p218) target = $region32
        $region31: #{tpu_custom_call.1} parent=23 // pred_region
          %s221 = sand.u32 %s20, 1
          %s222 = scalar_lea.sflag [#allocation12], %s221
          %s223 = sand.u32 %s70, 1
          %s224 = smul.addr %s223, 4
          %s225 = scalar_lea.vmem [#allocation11], %s224
          %s227 = ssub.s32 64, 64
          %228 = vsyncadd %s222, %s227
          %s229 = smul.addr %s27, 2
          %s230 = sadd.s32 %s28, %s229
          %s231 = smul.addr %s230, 32
          %s232 = scalar_lea.hbm %s1, %s231
          %s233 = sshll.u32 %s225, 4
          %s234 = int_to_ptr.vmem [resolvable:$true] %s233
          %239 = dma.hbm_to_vmem [thread:$0]  %s232, 64, %s234, %s222, 32, 32, 2
        $region32: #{tpu_custom_call.1} parent=23 // pred_fallthru
          _
      $region24: #{tpu_custom_call.1} parent=5 // pred_fallthru
        _
      %p240 = scmp.le.s32.totalorder 1, %s20
      %p241 = scmp.lt.s32.totalorder %s20, 3
      %p242 = pnand %p240, %p241
      %p243 = pneg %p242
      // Predicated region
      $region33: #{tpu_custom_call.1} parent=5 // pred_check
        _
      $region34: #{tpu_custom_call.1} parent=5 // pred_check_branch
        %245 = sbr.rel (%p242) target = $region36
      $region35: #{tpu_custom_call.1} parent=5 // pred_region
        %s246 = ssub.s32 %s20, 1
        %s247 = sand.u32 %s45, 1
        %s248 = scalar_lea.sflag [#allocation9], %s247
        %s249 = sand.u32 %s45, 1
        %s250 = smul.addr %s249, 16
        %s251 = scalar_lea.vmem [#allocation8], %s250
        // Predicated region
        $region37: #{tpu_custom_call.1} parent=35 // pred_check
          %p252 = pneg %p58
        $region38: #{tpu_custom_call.1} parent=35 // pred_check_branch
          %254 = sbr.rel (%p252) target = $region40
        $region39: #{tpu_custom_call.1} parent=35 // pred_region
          %255 = dma.done %s248, 256
        $region40: #{tpu_custom_call.1} parent=35 // pred_fallthru
          _
        %s256 = sand.u32 %s25, 1
        %s257 = scalar_lea.sflag [#allocation12], %s256
        %s258 = sand.u32 %s73, 1
        %s259 = smul.addr %s258, 4
        %s260 = scalar_lea.vmem [#allocation11], %s259
        // Predicated region
        $region41: #{tpu_custom_call.1} parent=35 // pred_check
          %p261 = pneg %p86
        $region42: #{tpu_custom_call.1} parent=35 // pred_check_branch
          %263 = sbr.rel (%p261) target = $region44
        $region43: #{tpu_custom_call.1} parent=35 // pred_region
          %264 = dma.done %s257, 64
        $region44: #{tpu_custom_call.1} parent=35 // pred_fallthru
          _
        // Predicated region
        $region45: #{tpu_custom_call.1} parent=35 // pred_check
          %p265 = pneg %p107
        $region46: #{tpu_custom_call.1} parent=35 // pred_check_branch
          %267 = sbr.rel (%p265) target = $region48
        $region47: #{tpu_custom_call.1} parent=35 // pred_region
          %268 = dma.done [#allocation12], 512
        $region48: #{tpu_custom_call.1} parent=35 // pred_fallthru
          _
        // Predicated region
        $region49: #{tpu_custom_call.1} parent=35 // pred_check
          %p269 = pneg %p128
        $region50: #{tpu_custom_call.1} parent=35 // pred_check_branch
          %271 = sbr.rel (%p269) target = $region52
        $region51: #{tpu_custom_call.1} parent=35 // pred_region
          %272 = dma.done [#allocation15], 16
        $region52: #{tpu_custom_call.1} parent=35 // pred_fallthru
          _
        %s273 = sand.u32 %s45, 1
        %s274 = scalar_lea.sflag [#allocation9], %s273
        %s275 = sand.u32 %s45, 1
        %s276 = smul.addr %s275, 16
        %s277 = scalar_lea.vmem [#allocation8], %s276
        %p278 = pneg %p58
        %p279 = pneg %p55
        %s280 = sand.u32 %s25, 1
        %s281 = scalar_lea.sflag [#allocation12], %s280
        %s282 = sand.u32 %s73, 1
        %s283 = smul.addr %s282, 4
        %s284 = scalar_lea.vmem [#allocation11], %s283
        %p285 = pneg %p86
        %p286 = pneg %p83
        %p287 = pneg %p107
        %p288 = pneg %p104
        %p289 = pneg %p128
        %p290 = pneg %p125
        %p291 = pneg %p154
        %p292 = pneg %p151
        %s293 = sand.u32 %s141, 1
        %s294 = scalar_lea.sflag [#allocation10], %s293
        %s295 = sand.u32 %s141, 1
        %s296 = smul.addr %s295, 16
        %s297 = scalar_lea.vmem [#allocation16], %s296
        %s298 = smul.u32 2, %s29
        %p301 = scmp.eq.s32.totalorder %s30, 0
        // Predicated region
        $region53: #{tpu_custom_call.1} parent=35 // pred_check
          %p302 = pneg %p301
        $region54: #{tpu_custom_call.1} parent=35 // pred_check_branch
          %304 = sbr.rel (%p302) target = $region56
        $region55: #{tpu_custom_call.1} parent=35 // pred_region
          %v305 = vld [vmem:[%s251] sm:$0xff]
          %v306 = vld [vmem:[%s251 + $0x8] sm:$0xff]
          %v307 = vld [vmem:[#allocation13] sm:$0xff]
          %v308 = vld [vmem:[#allocation13 + $0x8] sm:$0xff]
          %v309 = vld [vmem:[#allocation13 + $0x10] sm:$0xff]
          %v310 = vld [vmem:[#allocation13 + $0x18] sm:$0xff]
          %v311 = vld [vmem:[#allocation14] sm:$0x1]
          %v313 = vlaneseq
          %v314 = vshrl.u32 %v313, 7
          %v315 = vsub.s32 0, %v314
          %v316 = vrot.slane %v311, %v315
          %vm318 = vcmask 261120
          %v320 = vsel %vm318, %v305, 0
          %v323 = vsel %vm318, %v306, 0
          %325 = vmatprep.subr.mxu0 0.0
          %326 = vmatpush1.msra.mxu0 %v307
          %327 = vmatprep.subr.mxu0 0.0
          %328 = vmatpush1.msra.mxu0 %v308
          %329 = vmatprep.subr.mxu0 0.0
          %330 = vmatpush1.msra.mxu0 %v309
          %331 = vmatprep.subr.mxu0 0.0
          %332 = vmatpush1.msra.mxu0 %v310
          %333 = vmatprep.subr.mxu0 0.0
          %334 = vmatpush1.msra.mxu0 0.0
          %335 = vmatprep.subr.mxu0 0.0
          %336 = vmatpush1.msra.mxu0 0.0
          %337 = vmatprep.subr.mxu0 0.0
          %338 = vmatpush1.msra.mxu0 0.0
          %339 = vmatprep.subr.mxu0 0.0
          %340 = vmatpush1.msra.mxu0 0.0
          %341 = vmatprep.subr.mxu0 0.0
          %342 = vmatpush1.msra.mxu0 0.0
          %343 = vmatprep.subr.mxu0 0.0
          %344 = vmatpush1.msra.mxu0 0.0
          %345 = vmatprep.subr.mxu0 0.0
          %346 = vmatpush1.msra.mxu0 0.0
          %347 = vmatprep.subr.mxu0 0.0
          %348 = vmatpush1.msra.mxu0 0.0
          %349 = vmatprep.subr.mxu0 0.0
          %350 = vmatpush1.msra.mxu0 0.0
          %351 = vmatprep.subr.mxu0 0.0
          %352 = vmatpush1.msra.mxu0 0.0
          %353 = vmatprep.subr.mxu0 0.0
          %354 = vmatpush1.msra.mxu0 0.0
          %355 = vmatprep.subr.mxu0 0.0
          %356 = vmatpush1.msra.mxu0 0.0
          %357 = vmatprep.subr.mxu0 0.0
          %358 = vmatpush1.msra.mxu0 0.0
          %359 = vmatprep.subr.mxu0 0.0
          %360 = vmatpush1.msra.mxu0 0.0
          %361 = vmatprep.subr.mxu0 0.0
          %362 = vmatpush1.msra.mxu0 0.0
          %363 = vmatprep.subr.mxu0 0.0
          %364 = vmatpush1.msra.mxu0 0.0
          %365 = vmatprep.subr.mxu0 0.0
          %366 = vmatpush1.msra.mxu0 0.0
          %367 = vmatprep.subr.mxu0 0.0
          %368 = vmatpush1.msra.mxu0 0.0
          %369 = vmatprep.subr.mxu0 0.0
          %370 = vmatpush1.msra.mxu0 0.0
          %371 = vmatprep.subr.mxu0 0.0
          %372 = vmatpush1.msra.mxu0 0.0
          %373 = vmatprep.subr.mxu0 0.0
          %374 = vmatpush1.msra.mxu0 0.0
          %375 = vmatprep.subr.mxu0 0.0
          %376 = vmatpush1.msra.mxu0 0.0
          %377 = vmatprep.subr.mxu0 0.0
          %378 = vmatpush1.msra.mxu0 0.0
          %379 = vmatprep.subr.mxu0 0.0
          %380 = vmatpush1.msra.mxu0 0.0
          %381 = vmatprep.subr.mxu0 0.0
          %382 = vmatpush1.msra.mxu0 0.0
          %383 = vmatprep.subr.mxu0 0.0
          %384 = vmatpush1.msra.mxu0 0.0
          %385 = vmatprep.subr.mxu0 0.0
          %386 = vmatpush1.msra.mxu0 0.0
          %387 = vmatprep.subr.mxu0 0.0
          %388 = vmatpush1.msra.mxu0 0.0
          %389 = vmatprep.mubr.f32.mxu0 0.0
          %390 = vmatmul.mubr.f32.gmra.mrb[0].mxu0 %v320
          %v391 = vpop.f32.mrb[0].mxu0
          %v392 = vadd.f32 %v316, %v391
          %v393 = vpop.f32.mrb[0].mxu0
          %394 = vmatprep.mubr.f32.mxu0 0.0
          %395 = vmatmul.mubr.f32.gmra.mrb[0].mxu0 %v323
          %v396 = vpop.f32.mrb[0].mxu0
          %v397 = vadd.f32 %v316, %v396
          %v398 = vpop.f32.mrb[0].mxu0
          %399 = vdwg.mxu0
          %400 = vst [vmem:[#allocation2] sm:$0xff] %v392
          %401 = vst [vmem:[#allocation2 + $0x8] sm:$0xff] %v397
          %404 = vrot.lane.b32.xlu0 %v392, 2
          %v405 = vpop.permute.xlu0 %404
          %406 = vrot.lane.b32.xlu0 %v397, 2
          %v407 = vpop.permute.xlu0 %406
          %vm410 = vcmask 7168
          %411 = vst.msk [vmem:[#allocation3] sm:$0xff] %vm410, %v405
          %412 = vst.msk [vmem:[#allocation3 + $0x8] sm:$0xff] %vm410, %v407
          %413 = vrot.lane.b32.xlu0 %v392, 1
          %v414 = vpop.permute.xlu0 %413
          %415 = vrot.lane.b32.xlu0 %v397, 1
          %v416 = vpop.permute.xlu0 %415
          %419 = vst.msk [vmem:[#allocation4] sm:$0xff] %vm410, %v414
          %420 = vst.msk [vmem:[#allocation4 + $0x8] sm:$0xff] %vm410, %v416
          %421 = vst.msk [vmem:[#allocation5] sm:$0xff] %vm410, -inf
          %422 = vst.msk [vmem:[#allocation5 + $0x8] sm:$0xff] %vm410, -inf
          %423 = vst.msk [vmem:[#allocation6] sm:$0xff] %vm410, 0.0
          %424 = vst.msk [vmem:[#allocation6 + $0x8] sm:$0xff] %vm410, 0.0
          %425 = vst [vmem:[#allocation7] sm:$0xff] 0.0
          %426 = vst [vmem:[#allocation7 + $0x8] sm:$0xff] 0.0
        $region56: #{tpu_custom_call.1} parent=35 // pred_fallthru
          _
        %s427 = smul.u32 %s30, 16
        %v428 = vld [vmem:[#allocation3] sm:$0xff]
        %v429 = vld [vmem:[#allocation3 + $0x8] sm:$0xff]
        %s430 = scalar_lea.vmem [#allocation4], %s427
        %v431 = vld [vmem:[%s430] sm:$0xff]
        %v432 = vld [vmem:[%s430 + $0x8] sm:$0xff]
        %433 = vxpose.xlu0.b32.start [1/16] %v431, 128
        %434 = vxpose.xlu0.b32.cont [2/16] %v432, 128
        %435 = vxpose.xlu0.b32.cont [3/16] 0.0, 128
        %436 = vxpose.xlu0.b32.cont [4/16] 0.0, 128
        %437 = vxpose.xlu0.b32.cont [5/16] 0.0, 128
        %438 = vxpose.xlu0.b32.cont [6/16] 0.0, 128
        %439 = vxpose.xlu0.b32.cont [7/16] 0.0, 128
        %440 = vxpose.xlu0.b32.cont [8/16] 0.0, 128
        %441 = vxpose.xlu0.b32.cont [9/16] 0.0, 128
        %442 = vxpose.xlu0.b32.cont [10/16] 0.0, 128
        %443 = vxpose.xlu0.b32.cont [11/16] 0.0, 128
        %444 = vxpose.xlu0.b32.cont [12/16] 0.0, 128
        %445 = vxpose.xlu0.b32.cont [13/16] 0.0, 128
        %446 = vxpose.xlu0.b32.cont [14/16] 0.0, 128
        %447 = vxpose.xlu0.b32.cont [15/16] 0.0, 128
        %448 = vxpose.xlu0.b32.end [16/16] 0.0, 128
        %v449 = vpop.trf.xlu0
        %v450 = vpop.trf.xlu0
        %v451 = vpop.trf.xlu0
        %v452 = vpop.trf.xlu0
        %v453 = vpop.trf.xlu0
        %v454 = vpop.trf.xlu0
        %v455 = vpop.trf.xlu0
        %v456 = vpop.trf.xlu0
        %v457 = vpop.trf.xlu0
        %v458 = vpop.trf.xlu0
        %v459 = vpop.trf.xlu0
        %v460 = vpop.trf.xlu0
        %v461 = vpop.trf.xlu0
        %v462 = vpop.trf.xlu0
        %v463 = vpop.trf.xlu0
        %v464 = vpop.trf.xlu0
        %466 = vset.pattern.permute.xlu0 0
        %467 = vperm.xlu0 %466, %v428
        %v468 = vpop.permute.xlu0 %467
        %471 = vset.pattern.permute.xlu0 0
        %472 = vperm.xlu0 %471, %v429
        %v473 = vpop.permute.xlu0 %472
        %v475 = vlaneseq
        %v476 = vshrl.u32 %v475, 7
        %v477 = vsub.s32 0, %v476
        %v478 = vrot.slane %v449, %v477
        %v479 = vadd.f32 %v468, %v478
        %v480 = vadd.f32 %v473, %v478
        %vm481 = vcmp.gt.f32.partialorder %v479, 0.0
        %vm482 = vcmp.gt.f32.partialorder %v480, 0.0
        %v483 = vmul.f32 %v479, 0.2
        %v484 = vmul.f32 %v480, 0.2
        %v485 = vsel %vm481, %v479, %v483
        %v486 = vsel %vm482, %v480, %v484
        %v487 = vld [vmem:[%s260] sm:$0x3]
        %v488 = vld [vmem:[%s260 + $0x2] sm:$0x3]
        %vm489 = vnez %v487
        %vm490 = vnez %v488
        %v491 = vsel %vm489, 16843009, 0
        %v492 = vsel %vm490, 16843009, 0
        %v493 = vunpack.c.0.s8 %v491
        %v494 = vunpack.c.0.s8 %v492
        %vm495 = vcmp.ne.s32.totalorder %v493, 0
        %vm496 = vcmp.ne.s32.totalorder %v494, 0
        %v497 = vsel %vm495, %v485, -1e+09
        %v498 = vsel %vm496, %v486, -1e+09
        %v499 = vld [vmem:[#allocation5] sm:$0xff]
        %v500 = vld [vmem:[#allocation5 + $0x8] sm:$0xff]
        %vm501 = vcmask 130048
        %v502 = vsel %vm501, %v497, -inf
        %503 = vmax.xlane.f32.xlu0 %v502
        %v504 = vpop.xlane.xlu0 %503
        %v505 = vsel %vm501, %v498, -inf
        %506 = vmax.xlane.f32.xlu0 %v505
        %v507 = vpop.xlane.xlu0 %506
        %v508 = vmax.f32 %v499, %v504
        %v509 = vmax.f32 %v500, %v507
        %v510 = vsub.f32 %v499, %v508
        %v511 = vsub.f32 %v500, %v509
        %v512 = vmul.f32 %v510, 1.442695
        %v513 = vpow.pop %v512
        %v514 = vmul.f32 %v511, 1.442695
        %v515 = vpow.pop %v514
        %517 = vset.pattern.permute.xlu0 0
        %518 = vperm.xlu0 %517, %v508
        %v519 = vpop.permute.xlu0 %518
        %522 = vset.pattern.permute.xlu0 0
        %523 = vperm.xlu0 %522, %v509
        %v524 = vpop.permute.xlu0 %523
        %v526 = vsub.f32 %v497, %v519
        %v527 = vsub.f32 %v498, %v524
        %v528 = vmul.f32 %v526, 1.442695
        %v529 = vpow.pop %v528
        %v530 = vmul.f32 %v527, 1.442695
        %v531 = vpow.pop %v530
        %v532 = vld [vmem:[#allocation6] sm:$0xff]
        %v533 = vld [vmem:[#allocation6 + $0x8] sm:$0xff]
        %v534 = vmul.f32 %v513, %v532
        %v535 = vmul.f32 %v515, %v533
        %v536 = vsel %vm501, %v529, 0.0
        %537 = vadd.xlane.f32.xlu0 %v536
        %v538 = vpop.xlane.xlu0 %537
        %v539 = vsel %vm501, %v531, 0.0
        %540 = vadd.xlane.f32.xlu0 %v539
        %v541 = vpop.xlane.xlu0 %540
        %v542 = vadd.f32 %v534, %v538
        %v543 = vadd.f32 %v535, %v541
        %vm544 = vcmask 7168
        %545 = vst.msk [vmem:[#allocation6] sm:$0xff] %vm544, %v542
        %546 = vst.msk [vmem:[#allocation6 + $0x8] sm:$0xff] %vm544, %v543
        %547 = vst.msk [vmem:[#allocation5] sm:$0xff] %vm544, %v508
        %548 = vst.msk [vmem:[#allocation5 + $0x8] sm:$0xff] %vm544, %v509
        %s549 = scalar_lea.vmem [#allocation2], %s427
        %v550 = vld [vmem:[%s549] sm:$0xff]
        %v551 = vld [vmem:[%s549 + $0x8] sm:$0xff]
        %v553 = vsel %vm501, %v529, 0
        %v556 = vsel %vm501, %v531, 0
        %558 = vmatprep.subr.mxu0 0.0
        %559 = vmatpush1.msra.mxu0 %v550
        %560 = vmatprep.subr.mxu0 0.0
        %561 = vmatpush1.msra.mxu0 %v551
        %562 = vmatprep.subr.mxu0 0.0
        %563 = vmatpush1.msra.mxu0 0.0
        %564 = vmatprep.subr.mxu0 0.0
        %565 = vmatpush1.msra.mxu0 0.0
        %566 = vmatprep.subr.mxu0 0.0
        %567 = vmatpush1.msra.mxu0 0.0
        %568 = vmatprep.subr.mxu0 0.0
        %569 = vmatpush1.msra.mxu0 0.0
        %570 = vmatprep.subr.mxu0 0.0
        %571 = vmatpush1.msra.mxu0 0.0
        %572 = vmatprep.subr.mxu0 0.0
        %573 = vmatpush1.msra.mxu0 0.0
        %574 = vmatprep.subr.mxu0 0.0
        %575 = vmatpush1.msra.mxu0 0.0
        %576 = vmatprep.subr.mxu0 0.0
        %577 = vmatpush1.msra.mxu0 0.0
        %578 = vmatprep.subr.mxu0 0.0
        %579 = vmatpush1.msra.mxu0 0.0
        %580 = vmatprep.subr.mxu0 0.0
        %581 = vmatpush1.msra.mxu0 0.0
        %582 = vmatprep.subr.mxu0 0.0
        %583 = vmatpush1.msra.mxu0 0.0
        %584 = vmatprep.subr.mxu0 0.0
        %585 = vmatpush1.msra.mxu0 0.0
        %586 = vmatprep.subr.mxu0 0.0
        %587 = vmatpush1.msra.mxu0 0.0
        %588 = vmatprep.subr.mxu0 0.0
        %589 = vmatpush1.msra.mxu0 0.0
        %590 = vmatprep.subr.mxu0 0.0
        %591 = vmatpush1.msra.mxu0 0.0
        %592 = vmatprep.subr.mxu0 0.0
        %593 = vmatpush1.msra.mxu0 0.0
        %594 = vmatprep.subr.mxu0 0.0
        %595 = vmatpush1.msra.mxu0 0.0
        %596 = vmatprep.subr.mxu0 0.0
        %597 = vmatpush1.msra.mxu0 0.0
        %598 = vmatprep.subr.mxu0 0.0
        %599 = vmatpush1.msra.mxu0 0.0
        %600 = vmatprep.subr.mxu0 0.0
        %601 = vmatpush1.msra.mxu0 0.0
        %602 = vmatprep.subr.mxu0 0.0
        %603 = vmatpush1.msra.mxu0 0.0
        %604 = vmatprep.subr.mxu0 0.0
        %605 = vmatpush1.msra.mxu0 0.0
        %606 = vmatprep.subr.mxu0 0.0
        %607 = vmatpush1.msra.mxu0 0.0
        %608 = vmatprep.subr.mxu0 0.0
        %609 = vmatpush1.msra.mxu0 0.0
        %610 = vmatprep.subr.mxu0 0.0
        %611 = vmatpush1.msra.mxu0 0.0
        %612 = vmatprep.subr.mxu0 0.0
        %613 = vmatpush1.msra.mxu0 0.0
        %614 = vmatprep.subr.mxu0 0.0
        %615 = vmatpush1.msra.mxu0 0.0
        %616 = vmatprep.subr.mxu0 0.0
        %617 = vmatpush1.msra.mxu0 0.0
        %618 = vmatprep.subr.mxu0 0.0
        %619 = vmatpush1.msra.mxu0 0.0
        %620 = vmatprep.subr.mxu0 0.0
        %621 = vmatpush1.msra.mxu0 0.0
        %622 = vmatprep.mubr.f32.mxu0 0.0
        %623 = vmatmul.mubr.f32.gmra.mrb[0].mxu0 %v553
        %v624 = vpop.f32.mrb[0].mxu0
        %v625 = vadd.f32 0.0, %v624
        %v626 = vpop.f32.mrb[0].mxu0
        %627 = vmatprep.mubr.f32.mxu0 0.0
        %628 = vmatmul.mubr.f32.gmra.mrb[0].mxu0 %v556
        %v629 = vpop.f32.mrb[0].mxu0
        %v630 = vadd.f32 0.0, %v629
        %v631 = vpop.f32.mrb[0].mxu0
        %632 = vdwg.mxu0
        %v633 = vld [vmem:[#allocation7] sm:$0xff]
        %v634 = vld [vmem:[#allocation7 + $0x8] sm:$0xff]
        %636 = vset.pattern.permute.xlu0 0
        %637 = vperm.xlu0 %636, %v513
        %v638 = vpop.permute.xlu0 %637
        %641 = vset.pattern.permute.xlu0 0
        %642 = vperm.xlu0 %641, %v515
        %v643 = vpop.permute.xlu0 %642
        %v645 = vmul.f32 %v638, %v633
        %v646 = vmul.f32 %v643, %v634
        %v647 = vadd.f32 %v645, %v625
        %v648 = vadd.f32 %v646, %v630
        %649 = vst [vmem:[#allocation7] sm:$0xff] %v647
        %650 = vst [vmem:[#allocation7 + $0x8] sm:$0xff] %v648
        // Predicated region
        $region57: #{tpu_custom_call.1} parent=35 // pred_check
          %p651 = pneg %p301
        $region58: #{tpu_custom_call.1} parent=35 // pred_check_branch
          %653 = sbr.rel (%p651) target = $region60
        $region59: #{tpu_custom_call.1} parent=35 // pred_region
          %v654 = vld [vmem:[#allocation6] sm:$0xff]
          %v655 = vld [vmem:[#allocation6 + $0x8] sm:$0xff]
          %v656 = vrcp.pop %v654
          %v657 = vrcp.pop %v655
          %v658 = vld [vmem:[#allocation7] sm:$0xff]
          %v659 = vld [vmem:[#allocation7 + $0x8] sm:$0xff]
          %661 = vset.pattern.permute.xlu0 0
          %662 = vperm.xlu0 %661, %v656
          %v663 = vpop.permute.xlu0 %662
          %666 = vset.pattern.permute.xlu0 0
          %667 = vperm.xlu0 %666, %v657
          %v668 = vpop.permute.xlu0 %667
          %v670 = vmul.f32 %v658, %v663
          %v671 = vmul.f32 %v659, %v668
          %vm672 = vcmp.gt.f32.partialorder %v670, 0.0
          %vm673 = vcmp.gt.f32.partialorder %v671, 0.0
          %v674 = vmin.f32 %v670, 0.0
          %v675 = vmin.f32 %v671, 0.0
          %v676 = vmul.f32 %v674, 1.442695
          %v677 = vpow.pop %v676
          %v678 = vmul.f32 %v675, 1.442695
          %v679 = vpow.pop %v678
          %v680 = vsub.f32 %v677, 1.0
          %v681 = vsub.f32 %v679, 1.0
          %v682 = vsel %vm672, %v670, %v680
          %v683 = vsel %vm673, %v671, %v681
          %vm684 = vcmask 261120
          %685 = vst.msk [vmem:[%s297] sm:$0xff] %vm684, %v682
          %686 = vst.msk [vmem:[%s297 + $0x8] sm:$0xff] %vm684, %v683
        $region60: #{tpu_custom_call.1} parent=35 // pred_fallthru
          _
        %s687 = sand.u32 %s141, 1
        %s688 = scalar_lea.sflag [#allocation10], %s687
        %s689 = sand.u32 %s141, 1
        %s690 = smul.addr %s689, 16
        %s691 = scalar_lea.vmem [#allocation16], %s690
        // Predicated region
        $region61: #{tpu_custom_call.1} parent=35 // pred_check
          %p692 = pneg %p151
        $region62: #{tpu_custom_call.1} parent=35 // pred_check_branch
          %694 = sbr.rel (%p692) target = $region64
        $region63: #{tpu_custom_call.1} parent=35 // pred_region
          %s696 = ssub.s32 256, 256
          %697 = vsyncadd %s688, %s696
          %s698 = smul.addr %s29, 2
          %s699 = smul.addr %s698, 128
          %s700 = scalar_lea.hbm %s4, %s699
          %s701 = sshll.u32 %s691, 4
          %s702 = int_to_ptr.vmem [resolvable:$true] %s701
          %707 = dma.vmem_to_hbm [thread:$0]  %s702, 256, %s700, %s688, 128, 128, 8
        $region64: #{tpu_custom_call.1} parent=35 // pred_fallthru
          _
      $region36: #{tpu_custom_call.1} parent=5 // pred_fallthru
        _
      %p708 = scmp.le.s32.totalorder 2, %s20
      // Predicated region
      $region65: #{tpu_custom_call.1} parent=5 // pred_check
        %p709 = pneg %p708
      $region66: #{tpu_custom_call.1} parent=5 // pred_check_branch
        %711 = sbr.rel (%p709) target = $region68
      $region67: #{tpu_custom_call.1} parent=5 // pred_region
        %s712 = ssub.s32 %s20, 2
        // Predicated region
        $region69: #{tpu_custom_call.1} parent=67 // pred_check
          %p713 = pneg %p157
        $region70: #{tpu_custom_call.1} parent=67 // pred_check_branch
          %715 = sbr.rel (%p713) target = $region72
        $region71: #{tpu_custom_call.1} parent=67 // pred_region
          %s716 = sand.u32 %s142, 1
          %s717 = scalar_lea.sflag [#allocation10], %s716
          %s718 = sand.u32 %s142, 1
          %s719 = smul.addr %s718, 16
          %s720 = scalar_lea.vmem [#allocation16], %s719
          %721 = dma.done %s717, 256
        $region72: #{tpu_custom_call.1} parent=67 // pred_fallthru
          _
      $region68: #{tpu_custom_call.1} parent=5 // pred_fallthru
        _
    $region6: #{tpu_custom_call.1} parent=1 // loop_footer
      %s24 = sadd.s32 1, %s20
    $region7: #{tpu_custom_call.1} parent=1 // loop_footer_branch
      %19 = sbr.rel target = $region3
    $region8: #{tpu_custom_call.1} parent=1 // loop_exit
      _
    %722 = vsyncpa [#allocation9], 1
    %s723 = scalar_lea.sflag [#allocation9], 1
    %724 = vsyncpa %s723, 1
    %725 = vsyncpa [#allocation12], 1
    %s726 = scalar_lea.sflag [#allocation12], 1
    %727 = vsyncpa %s726, 1
    %728 = vsyncpa [#allocation15], 1
    %729 = vsyncpa [#allocation10], 1
    %s730 = scalar_lea.sflag [#allocation10], 1
    %731 = vsyncpa %s730, 1

</llo_original>
